<compile_context>
chip_gen: v7x
topology: tpu7x:2x2x1
jax: 0.10.0
libtpu: 0.0.40
codegen_flags: <defaults>
</compile_context>

<pallas_src>
import functools

import jax
import jax.numpy as jnp
from jax.experimental import pallas as pl
from jax.experimental.pallas import tpu as pltpu


def _node_features_kernel(x_ref, xf_ref, gate_ref, mjf_ref, mi_ref,
                          wu_ref, bu_ref, wvf_ref, bvf_ref,
                          out_ref, vxf_s, *, fold_g, aggregation):
    # x_ref:    (1, TI, H)       node features of this i-tile
    # xf_ref:   (1, P, G*H)      all node features, lane-folded (P = N // G)
    # gate_ref: (1, TI, P, G*H)  edge-gate tile, lane-folded
    # mjf_ref:  (1, P, G*H)      m_j lane-folded (each mask value repeated H times)
    # mi_ref:   (1, TI, 1)       m_i rows of this i-tile
    # wu_ref:   (H, H)           U weight
    # bu_ref:   (1, H)           U bias
    # wvf_ref:  (G*H, G*H)       block-diagonal V weight (= Wv when G == 1)
    # bvf_ref:  (1, G*H)         tiled V bias
    # out_ref:  (1, TI, H)
    # vxf_s:    (P, G*H) f32 scratch, persistent across i-tiles
    i = pl.program_id(1)
    h = out_ref.shape[2]

    # V-linear for all nodes (folded layout), once per batch element.
    @pl.when(i == 0)
    def _():
        vxf = jnp.dot(xf_ref[0], wvf_ref[...],
                      preferred_element_type=jnp.float32)
        vxf = vxf + bvf_ref[...].astype(jnp.float32)
        vxf_s[...] = mjf_ref[0].astype(jnp.float32) * vxf      # fold m_j into Vx

    # U-linear for this tile's rows only (tiny matmul; MXU is otherwise idle).
    u = jnp.dot(x_ref[0], wu_ref[...], preferred_element_type=jnp.float32)
    u = u + bu_ref[...].astype(jnp.float32)                    # (TI, H)

    gate = gate_ref[0]                                         # (TI, P, G*H)
    if gate.dtype != jnp.float32:
        gate = gate.astype(jnp.float32)
    vxf = vxf_s[...]                                           # (P, G*H)

    def lane_fold(a):                                          # (TI, G*H) -> (TI, H)
        if fold_g == 1:
            return a
        acc = a[:, :h]
        for g in range(1, fold_g):
            acc = acc + a[:, g * h:(g + 1) * h]
        return acc

    # num_ih = sum_j gate_ijh * m_j * Vx_jh   (m_j already folded into vxf)
    num = lane_fold(jnp.sum(gate * vxf[None, :, :], axis=1))   # (TI, H)

    if aggregation == "mean":
        mjf = mjf_ref[0].astype(jnp.float32)                   # (P, G*H)
        den = lane_fold(jnp.sum(gate * mjf[None, :, :], axis=1))
        agg = num / (1e-20 + den)
    else:  # "sum"
        agg = num

    mi = mi_ref[0].astype(jnp.float32)                         # (TI, 1)
    out_ref[0] = (mi * (u + agg)).astype(out_ref.dtype)


def _choose_tile_i(n, p, gh, itemsize, target_bytes=4 * 1024 * 1024):
    """Largest i-tile (multiple of 8 dividing N, or N itself) whose padded
    VMEM footprint for one gate buffer stays under target_bytes."""
    pad_p = ((p + 7) // 8) * 8              # sublane padding
    pad_gh = ((gh + 127) // 128) * 128      # lane padding
    row_bytes = pad_p * pad_gh * itemsize   # one i-row of the folded gate tile
    cands = sorted({d for d in range(8, n + 1, 8) if n % d == 0} | {n})
    ti = cands[0]
    for c in cands:
        if c * row_bytes <= target_bytes:
            ti = max(ti, c)
    return ti


def node_features(x, edge_gate, mask, wu, bu, wv, bv, aggregation="mean",
                  allow_fold=True):
    if aggregation not in ("mean", "sum"):
        raise ValueError(f"unknown aggregation: {aggregation}")
    B, N, H = x.shape
    assert edge_gate.shape == (B, N, N, H)
    assert mask.shape == (B, N)

    # Lane-fold factor: pack G consecutive j-nodes into the 128-lane axis.
    if allow_fold and H < 128 and 128 % H == 0 and N % (128 // H) == 0:
        G = 128 // H
    else:
        G = 1
    P = N // G
    GH = G * H

    mask_f = mask.astype(jnp.float32)
    mi3 = mask_f[..., None]                                      # (B, N, 1)
    # m_j folded: lane block g of row p holds mask[p*G + g] repeated H times.
    mjf = jnp.repeat(mask_f.reshape(B, P, G), H, axis=-1)        # (B, P, GH)

    xf = x.reshape(B, P, GH)                                     # free reshape
    gate_f = edge_gate.reshape(B, N, P, GH)                      # free reshape
    if G > 1:
        wvf = jnp.kron(jnp.eye(G, dtype=wv.dtype), wv)           # block-diag (GH, GH)
    else:
        wvf = wv
    bvf = jnp.tile(bv.reshape(-1), G).reshape(1, GH)
    bu2 = bu.reshape(1, H)

    ti = _choose_tile_i(N, P, GH, edge_gate.dtype.itemsize)
    grid = (B, N // ti)

    kernel = functools.partial(_node_features_kernel, fold_g=G,
                               aggregation=aggregation)

    return pl.pallas_call(
        kernel,
        out_shape=jax.ShapeDtypeStruct((B, N, H), x.dtype),
        grid_spec=pltpu.PrefetchScalarGridSpec(
            num_scalar_prefetch=0,
            grid=grid,
            in_specs=[
                pl.BlockSpec((1, ti, H), lambda b, i: (b, i, 0)),        # x tile
                pl.BlockSpec((1, P, GH), lambda b, i: (b, 0, 0)),        # x folded
                pl.BlockSpec((1, ti, P, GH), lambda b, i: (b, i, 0, 0)), # gate folded
                pl.BlockSpec((1, P, GH), lambda b, i: (b, 0, 0)),        # m_j folded
                pl.BlockSpec((1, ti, 1), lambda b, i: (b, i, 0)),        # m_i tile
                pl.BlockSpec((H, H), lambda b, i: (0, 0)),               # Wu
                pl.BlockSpec((1, H), lambda b, i: (0, 0)),               # bu
                pl.BlockSpec((GH, GH), lambda b, i: (0, 0)),             # Wv folded
                pl.BlockSpec((1, GH), lambda b, i: (0, 0)),              # bv folded
            ],
            out_specs=pl.BlockSpec((1, ti, H), lambda b, i: (b, i, 0)),
            scratch_shapes=[
                pltpu.VMEM((P, GH), jnp.float32),   # masked Vx (folded), per batch
            ],
        ),
        compiler_params=pltpu.CompilerParams(
            dimension_semantics=("parallel", "arbitrary"),
            vmem_limit_bytes=32 * 1024 * 1024,
        ),
    )(x, xf, gate_f, mjf, mi3, wu, bu2, wvf, bvf)


def node_features_ref(x, edge_gate, mask, wu, bu, wv, bv, aggregation="mean"):
    """Pure-JAX reference mirroring the PyTorch forward exactly."""
    m = mask.astype(x.dtype)
    ux = m[..., None] * (x @ wu + bu)                       # (B, N, H)
    vx = m[..., None] * (x @ wv + bv)                       # (B, N, H)
    gate = edge_gate * m[:, :, None, None] * m[:, None, :, None]
    gate_vx = gate * vx[:, None, :, :]                      # (B, N, N, H)
    num = jnp.sum(gate_vx, axis=2)
    if aggregation == "mean":
        return ux + num / (1e-20 + jnp.sum(gate, axis=2))
    return ux + num


if __name__ == "__main__":
    B, N, H = 2, 8, 32
    key = jax.random.PRNGKey(0)
    kx, kg, km, kwu, kbu, kwv, kbv = jax.random.split(key, 7)

    x = jax.random.normal(kx, (B, N, H), dtype=jnp.float32)
    edge_gate = jax.nn.sigmoid(
        jax.random.normal(kg, (B, N, N, H), dtype=jnp.float32))
    mask = (jax.random.uniform(km, (B, N)) < 0.75).astype(jnp.float32)

    # Linear parameters stored as (in, out) so y = x @ W + b.
    scale = 1.0 / jnp.sqrt(H)
    wu = scale * jax.random.normal(kwu, (H, H), dtype=jnp.float32)
    bu = scale * jax.random.normal(kbu, (H,), dtype=jnp.float32)
    wv = scale * jax.random.normal(kwv, (H, H), dtype=jnp.float32)
    bv = scale * jax.random.normal(kbv, (H,), dtype=jnp.float32)

    cases = [
        ("mean", True),    # lane-folded path (G = 128 // H = 4)
        ("mean", False),   # plain path (G = 1)
        ("sum", True),     # folded, sum aggregation
    ]
    for aggregation, allow_fold in cases:
        out = node_features(x, edge_gate, mask, wu, bu, wv, bv,
                            aggregation=aggregation, allow_fold=allow_fold)
        out = jax.block_until_ready(out)
        ref = node_features_ref(x, edge_gate, mask, wu, bu, wv, bv,
                                aggregation=aggregation)
        assert out.shape == (B, N, H)
        assert jnp.allclose(out, ref, rtol=1e-5, atol=1e-5), (
            f"[{aggregation}, fold={allow_fold}] max abs err = "
            f"{jnp.max(jnp.abs(out - ref))}")

    print("KERNEL_OK")
</pallas_src>

<mosaic_0001>
module attributes {stable_mosaic.version = 11 : i64} {
  func.func @_node_features_kernel(%arg0: i32, %arg1: i32, %arg2: memref<1x8x32xf32, #tpu.memory_space<vmem>>, %arg3: memref<1x2x128xf32, #tpu.memory_space<vmem>>, %arg4: memref<1x8x2x128xf32, #tpu.memory_space<vmem>>, %arg5: memref<1x2x128xf32, #tpu.memory_space<vmem>>, %arg6: memref<1x8x1xf32, #tpu.memory_space<vmem>>, %arg7: memref<32x32xf32, #tpu.memory_space<vmem>>, %arg8: memref<1x32xf32, #tpu.memory_space<vmem>>, %arg9: memref<128x128xf32, #tpu.memory_space<vmem>>, %arg10: memref<1x128xf32, #tpu.memory_space<vmem>>, %arg11: memref<1x8x32xf32, #tpu.memory_space<vmem>>, %arg12: memref<2x128xf32, #tpu.memory_space<vmem>>) attributes {dimension_semantics = [#tpu.dimension_semantics<parallel>, #tpu.dimension_semantics<arbitrary>], iteration_bounds = array<i64: 2, 1>, scalar_prefetch = 0 : i64, scratch_operands = 1 : i64, tpu.core_type = #tpu.core_type<tc>, window_params = [{transform_indices = @transform_0, window_bounds = array<i64: 1, 8, 32>}, {transform_indices = @transform_1, window_bounds = array<i64: 1, 2, 128>}, {transform_indices = @transform_2, window_bounds = array<i64: 1, 8, 2, 128>}, {transform_indices = @transform_3, window_bounds = array<i64: 1, 2, 128>}, {transform_indices = @transform_4, window_bounds = array<i64: 1, 8, 1>}, {pipeline_mode = #tpu.pipeline_mode<synchronous>, transform_indices = @transform_5, window_bounds = array<i64: 32, 32>}, {pipeline_mode = #tpu.pipeline_mode<synchronous>, transform_indices = @transform_6, window_bounds = array<i64: 1, 32>}, {pipeline_mode = #tpu.pipeline_mode<synchronous>, transform_indices = @transform_7, window_bounds = array<i64: 128, 128>}, {pipeline_mode = #tpu.pipeline_mode<synchronous>, transform_indices = @transform_8, window_bounds = array<i64: 1, 128>}, {transform_indices = @transform_9, window_bounds = array<i64: 1, 8, 32>}]} {
    %c0_i32 = arith.constant 0 : i32
    %0 = arith.cmpi eq, %arg1, %c0_i32 : i32
    %1 = arith.extui %0 : i1 to i32
    %c0_i32_0 = arith.constant 0 : i32
    %2 = arith.cmpi ne, %1, %c0_i32_0 : i32
    scf.if %2 {
      %c0_25 = arith.constant 0 : index
      %c0_26 = arith.constant 0 : index
      %c0_27 = arith.constant 0 : index
      %48 = vector.load %arg3[%c0_25, %c0_26, %c0_27] : memref<1x2x128xf32, #tpu.memory_space<vmem>>, vector<1x2x128xf32>
      %49 = vector.shape_cast %48 : vector<1x2x128xf32> to vector<2x128xf32>
      %c0_28 = arith.constant 0 : index
      %c0_29 = arith.constant 0 : index
      %50 = vector.load %arg9[%c0_28, %c0_29] : memref<128x128xf32, #tpu.memory_space<vmem>>, vector<128x128xf32>
      %cst_30 = arith.constant dense<0.000000e+00> : vector<2x128xf32>
      %51 = tpu.matmul %49, %50, %cst_30 {dimension_numbers = #tpu.dot_dimension_numbers<[1], [0], [0], [1], [0, 0, 1, 1], [], []>} : vector<2x128xf32>, vector<128x128xf32>, vector<2x128xf32> -> vector<2x128xf32>
      %c0_31 = arith.constant 0 : index
      %c0_32 = arith.constant 0 : index
      %52 = vector.load %arg10[%c0_31, %c0_32] : memref<1x128xf32, #tpu.memory_space<vmem>>, vector<1x128xf32>
      %53 = vector.broadcast %52 : vector<1x128xf32> to vector<2x128xf32>
      %54 = arith.addf %51, %53 : vector<2x128xf32>
      %c0_33 = arith.constant 0 : index
      %c0_34 = arith.constant 0 : index
      %c0_35 = arith.constant 0 : index
      %55 = vector.load %arg5[%c0_33, %c0_34, %c0_35] : memref<1x2x128xf32, #tpu.memory_space<vmem>>, vector<1x2x128xf32>
      %56 = vector.shape_cast %55 : vector<1x2x128xf32> to vector<2x128xf32>
      %57 = arith.mulf %56, %54 : vector<2x128xf32>
      %c0_36 = arith.constant 0 : index
      %c0_37 = arith.constant 0 : index
      %58 = vector.load %arg12[%c0_36, %c0_37] : memref<2x128xf32, #tpu.memory_space<vmem>>, vector<2x128xf32>
      tpu.vector_store %arg12[%c0_36, %c0_37], %57 {strides = array<i32>} : memref<2x128xf32, #tpu.memory_space<vmem>>, vector<2x128xf32>,
    } else {
    }
    %c0 = arith.constant 0 : index
    %c0_1 = arith.constant 0 : index
    %c0_2 = arith.constant 0 : index
    %3 = vector.load %arg2[%c0, %c0_1, %c0_2] : memref<1x8x32xf32, #tpu.memory_space<vmem>>, vector<1x8x32xf32>
    %4 = vector.shape_cast %3 : vector<1x8x32xf32> to vector<8x32xf32>
    %c0_3 = arith.constant 0 : index
    %c0_4 = arith.constant 0 : index
    %5 = vector.load %arg7[%c0_3, %c0_4] : memref<32x32xf32, #tpu.memory_space<vmem>>, vector<32x32xf32>
    %cst = arith.constant dense<0.000000e+00> : vector<8x32xf32>
    %6 = tpu.matmul %4, %5, %cst {dimension_numbers = #tpu.dot_dimension_numbers<[1], [0], [0], [1], [0, 0, 1, 1], [], []>} : vector<8x32xf32>, vector<32x32xf32>, vector<8x32xf32> -> vector<8x32xf32>
    %c0_5 = arith.constant 0 : index
    %c0_6 = arith.constant 0 : index
    %7 = vector.load %arg8[%c0_5, %c0_6] : memref<1x32xf32, #tpu.memory_space<vmem>>, vector<1x32xf32>
    %8 = vector.broadcast %7 : vector<1x32xf32> to vector<8x32xf32>
    %9 = arith.addf %6, %8 : vector<8x32xf32>
    %c0_7 = arith.constant 0 : index
    %c0_8 = arith.constant 0 : index
    %c0_9 = arith.constant 0 : index
    %c0_10 = arith.constant 0 : index
    %10 = vector.load %arg4[%c0_7, %c0_8, %c0_9, %c0_10] : memref<1x8x2x128xf32, #tpu.memory_space<vmem>>, vector<1x8x2x128xf32>
    %11 = vector.shape_cast %10 : vector<1x8x2x128xf32> to vector<8x2x128xf32>
    %c0_11 = arith.constant 0 : index
    %c0_12 = arith.constant 0 : index
    %12 = vector.load %arg12[%c0_11, %c0_12] : memref<2x128xf32, #tpu.memory_space<vmem>>, vector<2x128xf32>
    %13 = vector.shape_cast %12 : vector<2x128xf32> to vector<1x2x128xf32>
    %14 = vector.broadcast %13 : vector<1x2x128xf32> to vector<8x2x128xf32>
    %15 = arith.mulf %11, %14 : vector<8x2x128xf32>
    %cst_13 = arith.constant dense<0.000000e+00> : vector<8x128xf32>
    %16 = vector.multi_reduction <add>, %15, %cst_13 [1] : vector<8x2x128xf32> to vector<8x128xf32>
    %17 = vector.extract_strided_slice %16 {offsets = [0, 0], sizes = [8, 32], strides = [1, 1]} : vector<8x128xf32> to vector<8x32xf32>
    %18 = vector.extract_strided_slice %16 {offsets = [0, 32], sizes = [8, 32], strides = [1, 1]} : vector<8x128xf32> to vector<8x32xf32>
    %19 = arith.addf %17, %18 : vector<8x32xf32>
    %20 = vector.extract_strided_slice %16 {offsets = [0, 64], sizes = [8, 32], strides = [1, 1]} : vector<8x128xf32> to vector<8x32xf32>
    %21 = arith.addf %19, %20 : vector<8x32xf32>
    %22 = vector.extract_strided_slice %16 {offsets = [0, 96], sizes = [8, 32], strides = [1, 1]} : vector<8x128xf32> to vector<8x32xf32>
    %23 = arith.addf %21, %22 : vector<8x32xf32>
    %c0_14 = arith.constant 0 : index
    %c0_15 = arith.constant 0 : index
    %c0_16 = arith.constant 0 : index
    %24 = vector.load %arg5[%c0_14, %c0_15, %c0_16] : memref<1x2x128xf32, #tpu.memory_space<vmem>>, vector<1x2x128xf32>
    %25 = vector.shape_cast %24 : vector<1x2x128xf32> to vector<2x128xf32>
    %26 = vector.shape_cast %25 : vector<2x128xf32> to vector<1x2x128xf32>
    %27 = vector.broadcast %26 : vector<1x2x128xf32> to vector<8x2x128xf32>
    %28 = arith.mulf %11, %27 : vector<8x2x128xf32>
    %cst_17 = arith.constant dense<0.000000e+00> : vector<8x128xf32>
    %29 = vector.multi_reduction <add>, %28, %cst_17 [1] : vector<8x2x128xf32> to vector<8x128xf32>
    %30 = vector.extract_strided_slice %29 {offsets = [0, 0], sizes = [8, 32], strides = [1, 1]} : vector<8x128xf32> to vector<8x32xf32>
    %31 = vector.extract_strided_slice %29 {offsets = [0, 32], sizes = [8, 32], strides = [1, 1]} : vector<8x128xf32> to vector<8x32xf32>
    %32 = arith.addf %30, %31 : vector<8x32xf32>
    %33 = vector.extract_strided_slice %29 {offsets = [0, 64], sizes = [8, 32], strides = [1, 1]} : vector<8x128xf32> to vector<8x32xf32>
    %34 = arith.addf %32, %33 : vector<8x32xf32>
    %35 = vector.extract_strided_slice %29 {offsets = [0, 96], sizes = [8, 32], strides = [1, 1]} : vector<8x128xf32> to vector<8x32xf32>
    %36 = arith.addf %34, %35 : vector<8x32xf32>
    %cst_18 = arith.constant 9.99999968E-21 : f32
    %37 = vector.broadcast %cst_18 : f32 to vector<8x32xf32>
    %38 = arith.addf %37, %36 : vector<8x32xf32>
    %39 = arith.divf %23, %38 : vector<8x32xf32>
    %c0_19 = arith.constant 0 : index
    %c0_20 = arith.constant 0 : index
    %c0_21 = arith.constant 0 : index
    %40 = vector.load %arg6[%c0_19, %c0_20, %c0_21] : memref<1x8x1xf32, #tpu.memory_space<vmem>>, vector<1x8x1xf32>
    %41 = vector.shape_cast %40 : vector<1x8x1xf32> to vector<8x1xf32>
    %42 = arith.addf %9, %39 : vector<8x32xf32>
    %43 = vector.broadcast %41 : vector<8x1xf32> to vector<8x32xf32>
    %44 = arith.mulf %43, %42 : vector<8x32xf32>
    %c0_22 = arith.constant 0 : index
    %c0_23 = arith.constant 0 : index
    %c0_24 = arith.constant 0 : index
    %45 = vector.load %arg11[%c0_22, %c0_23, %c0_24] : memref<1x8x32xf32, #tpu.memory_space<vmem>>, vector<1x8x32xf32>
    %46 = vector.shape_cast %45 : vector<1x8x32xf32> to vector<8x32xf32>
    %47 = vector.shape_cast %44 : vector<8x32xf32> to vector<1x8x32xf32>
    tpu.vector_store %arg11[%c0_22, %c0_23, %c0_24], %47 {strides = array<i32>} : memref<1x8x32xf32, #tpu.memory_space<vmem>>, vector<1x8x32xf32>,
    return
  }
  func.func @transform_0(%arg0: i32, %arg1: i32) -> (i32, i32, i32) {
    %c0_i32 = arith.constant 0 : i32
    %c0_i32_0 = arith.constant 0 : i32
    return %arg0, %arg1, %c0_i32 : i32, i32, i32
  }
  func.func @transform_1(%arg0: i32, %arg1: i32) -> (i32, i32, i32) {
    %c0_i32 = arith.constant 0 : i32
    %c0_i32_0 = arith.constant 0 : i32
    %c0_i32_1 = arith.constant 0 : i32
    return %arg0, %c0_i32, %c0_i32_0 : i32, i32, i32
  }
  func.func @transform_2(%arg0: i32, %arg1: i32) -> (i32, i32, i32, i32) {
    %c0_i32 = arith.constant 0 : i32
    %c0_i32_0 = arith.constant 0 : i32
    %c0_i32_1 = arith.constant 0 : i32
    return %arg0, %arg1, %c0_i32, %c0_i32_0 : i32, i32, i32, i32
  }
  func.func @transform_3(%arg0: i32, %arg1: i32) -> (i32, i32, i32) {
    %c0_i32 = arith.constant 0 : i32
    %c0_i32_0 = arith.constant 0 : i32
    %c0_i32_1 = arith.constant 0 : i32
    return %arg0, %c0_i32, %c0_i32_0 : i32, i32, i32
  }
  func.func @transform_4(%arg0: i32, %arg1: i32) -> (i32, i32, i32) {
    %c0_i32 = arith.constant 0 : i32
    %c0_i32_0 = arith.constant 0 : i32
    return %arg0, %arg1, %c0_i32 : i32, i32, i32
  }
  func.func @transform_5(%arg0: i32, %arg1: i32) -> (i32, i32) {
    %c0_i32 = arith.constant 0 : i32
    %c0_i32_0 = arith.constant 0 : i32
    %c0_i32_1 = arith.constant 0 : i32
    return %c0_i32, %c0_i32_0 : i32, i32
  }
  func.func @transform_6(%arg0: i32, %arg1: i32) -> (i32, i32) {
    %c0_i32 = arith.constant 0 : i32
    %c0_i32_0 = arith.constant 0 : i32
    %c0_i32_1 = arith.constant 0 : i32
    return %c0_i32, %c0_i32_0 : i32, i32
  }
  func.func @transform_7(%arg0: i32, %arg1: i32) -> (i32, i32) {
    %c0_i32 = arith.constant 0 : i32
    %c0_i32_0 = arith.constant 0 : i32
    %c0_i32_1 = arith.constant 0 : i32
    return %c0_i32, %c0_i32_0 : i32, i32
  }
  func.func @transform_8(%arg0: i32, %arg1: i32) -> (i32, i32) {
    %c0_i32 = arith.constant 0 : i32
    %c0_i32_0 = arith.constant 0 : i32
    %c0_i32_1 = arith.constant 0 : i32
    return %c0_i32, %c0_i32_0 : i32, i32
  }
  func.func @transform_9(%arg0: i32, %arg1: i32) -> (i32, i32, i32) {
    %c0_i32 = arith.constant 0 : i32
    %c0_i32_0 = arith.constant 0 : i32
    return %arg0, %arg1, %c0_i32 : i32, i32, i32
  }
}

</mosaic_0001>

<llo_original>
// kernel: tpu_custom_call.1
$region0: #{tpu_custom_call.1}
  #allocation0 [shape = 'u32[]', space=smem, size = 0x4, offset = 0x4, fixed_abs, tag = 'smem constant byte address 0x4 - core index']
  #allocation1 [shape = 'u32[144,128]{1,0:T(1,128)}', space=vmem, size = 0x12000, scoped, tag = 'internal scratch']
  #allocation2 [shape = 'f32[2,128]{1,0:T(2,128)}', space=vmem, size = 0x400, scoped, tag = 'scratch operand']
  %s0 = inlined_call_operand.hbm [shape: f32[2,8,32], index: 0, kind: input, shape index: {}]
  %s1 = inlined_call_operand.vmem [shape: f32[2,2,128], index: 1, kind: input, shape index: {}]
  %s2 = inlined_call_operand.hbm [shape: f32[2,8,2,128], index: 2, kind: input, shape index: {}]
  %s3 = inlined_call_operand.hbm [shape: f32[2,2,128], index: 3, kind: input, shape index: {}]
  %s4 = inlined_call_operand.vmem [shape: f32[2,8,1], index: 4, kind: input, shape index: {}]
  %s5 = inlined_call_operand.vmem [shape: f32[32,32], index: 5, kind: input, shape index: {}]
  %s6 = inlined_call_operand.vmem [shape: f32[1,32], index: 6, kind: input, shape index: {}]
  %s7 = inlined_call_operand.hbm [shape: f32[128,128], index: 7, kind: input, shape index: {}]
  %s8 = inlined_call_operand.vmem [shape: f32[1,128], index: 8, kind: input, shape index: {}]
  %s9 = inlined_call_operand.hbm [shape: f32[2,8,32], index: 9, kind: output, shape index: {}]
  %s10 = sld [smem:[#allocation0]]
  $region89: #{tpu_custom_call.1} parent=0
    _
  %s12 = ssub.s32 1, %s10
  %s13 = scalar_select 0, %s12, %s10
  $region1: #{tpu_custom_call.1} parent=0
    #allocation3 [shape = 'u8[8192]{0}', space=vmem, size = 0x2000, scoped, tag = 'input window, operand 0']
    #allocation4 [shape = 's32[2]{0}', space=sflag, size = 0x8, scoped, tag = 'scoped memory for tpu_custom_call.1']
    #allocation5 [shape = 's32[2]{0}', space=sflag, size = 0x8, scoped, tag = 'scoped memory for tpu_custom_call.1']
    #allocation6 [shape = 'u8[16384]{0}', space=vmem, size = 0x4000, scoped, tag = 'input window, operand 2']
    #allocation7 [shape = 's32[2]{0}', space=sflag, size = 0x8, scoped, tag = 'scoped memory for tpu_custom_call.1']
    #allocation8 [shape = 'u8[2048]{0}', space=vmem, size = 0x800, scoped, tag = 'input window, operand 3']
    #allocation9 [shape = 'u8[65536]{0}', space=vmem, size = 0x10000, scoped, tag = 'input window, operand 7, single buffered']
    #allocation10 [shape = 's32[1]{0}', space=sflag, size = 0x4, scoped, tag = 'scoped memory for tpu_custom_call.1']
    #allocation11 [shape = 'u8[8192]{0}', space=vmem, size = 0x2000, scoped, tag = 'output window, operand 0']
    %14 = vsyncpa [#allocation4], 0
    %s15 = scalar_lea.sflag [#allocation4], 1
    %16 = vsyncpa %s15, 0
    %17 = vsyncpa [#allocation7], 0
    %s18 = scalar_lea.sflag [#allocation7], 1
    %19 = vsyncpa %s18, 0
    %20 = vsyncpa [#allocation10], 0
    %21 = vsyncpa [#allocation5], 0
    %s22 = scalar_lea.sflag [#allocation5], 1
    %23 = vsyncpa %s22, 0
    loop: start=0, step=1, limit=4
    $region2: #{tpu_custom_call.1} parent=1 // loop_pre_header
      _
    $region3: #{tpu_custom_call.1} parent=1 // loop_header
      %s25 = sphi 0, %s29
      %p26 = scmp.ge.s32.totalorder %s25, 4
      %s32 = sphi 0, %s44
      %s33 = sphi 0, %s40
      %s34 = sphi 0, %s32
      %s35 = sphi 0, %s33
      %s36 = sphi 0, %s34
      %s37 = sphi 0, %s35
      %s49 = sphi 0, %s51
      %s52 = sphi 0, %s49
      %s53 = sphi 0, %s52
      %s69 = sphi 0, %s53
      %s75 = sphi 0, %s77
      %s78 = sphi 0, %s75
      %s79 = sphi 0, %s78
      %s95 = sphi 0, %s79
      %s103 = sphi 0, %s105
      %s106 = sphi 0, %s103
      %s107 = sphi 0, %s106
      %s123 = sphi 0, %s107
      %s129 = sphi 0, %s131
      %s132 = sphi 0, %s129
      %s133 = sphi 0, %s132
      %s149 = sphi 0, %s133
      %s157 = sphi 0, %s159
      %s160 = sphi 0, %s157
      %s161 = sphi 0, %s160
      %s177 = sphi 0, %s161
      %s181 = sphi 0, %s181
      %s183 = sphi 0, %s181
      %s184 = sphi 0, %s183
      %s198 = sphi 0, %s184
      %s202 = sphi 0, %s202
      %s204 = sphi 0, %s202
      %s205 = sphi 0, %s204
      %s219 = sphi 0, %s205
      %s223 = sphi 0, %s223
      %s225 = sphi 0, %s223
      %s226 = sphi 0, %s225
      %s240 = sphi 0, %s226
      %s244 = sphi 0, %s244
      %s246 = sphi 0, %s244
      %s247 = sphi 0, %s246
      %s261 = sphi 0, %s247
      %s269 = sphi 0, %s271
      %s272 = sphi 0, %s269
      %s273 = sphi 0, %s272
      %s289 = sphi 0, %s273
    $region4: #{tpu_custom_call.1} parent=1 // loop_header_branch
      %28 = sbr.rel (%p26) target = $region8
    $region5: #{tpu_custom_call.1} parent=1 // loop_body
      %s30 = ssub.s32 %s25, 1
      %s31 = ssub.s32 %s25, 2
      %s38 = sadd.s32 1, %s33
      %p39 = scmp.ge.s32.totalorder %s38, 1
      %s40 = scalar_select %p39, 0, %s38
      %s41 = sadd.s32 1, %s32
      %s42 = scalar_select %p39, %s41, %s32
      %p43 = scmp.ge.s32.totalorder %s42, 2
      %s44 = scalar_select %p43, 0, %s42
      %s45 = ssub.s32 %s32, %s44
      %s46 = ssub.s32 %s33, %s40
      %s47 = sor.u32 %s45, %s46
      %p48 = scmp.eq.s32.totalorder %s47, 0
      %s50 = sadd.s32 %s49, 1
      %s51 = scalar_select %p48, %s49, %s50
      %p54 = pneg %p48
      %p55 = scmp.eq.s32.totalorder %s25, 1
      %p56 = por %p54, %p55
      %p57 = scmp.ne.s32.totalorder %s49, %s52
      %p58 = scmp.eq.s32.totalorder %s25, 0
      %p59 = por %p57, %p58
      %p60 = scmp.ne.s32.totalorder %s49, %s52
      %p61 = scmp.eq.s32.totalorder %s30, 1
      %p62 = por %p60, %p61
      %p63 = scmp.ne.s32.totalorder %s52, %s53
      %p64 = scmp.eq.s32.totalorder %s30, 0
      %p65 = por %p63, %p64
      %p66 = scmp.ne.s32.totalorder %s52, %s53
      %p67 = scmp.eq.s32.totalorder %s31, 1
      %p68 = por %p66, %p67
      %p70 = scmp.ne.s32.totalorder %s53, %s69
      %p71 = scmp.eq.s32.totalorder %s31, 0
      %p72 = por %p70, %p71
      %s73 = ssub.s32 %s32, %s44
      %p74 = scmp.eq.s32.totalorder %s73, 0
      %s76 = sadd.s32 %s75, 1
      %s77 = scalar_select %p74, %s75, %s76
      %p80 = pneg %p74
      %p81 = scmp.eq.s32.totalorder %s25, 1
      %p82 = por %p80, %p81
      %p83 = scmp.ne.s32.totalorder %s75, %s78
      %p84 = scmp.eq.s32.totalorder %s25, 0
      %p85 = por %p83, %p84
      %p86 = scmp.ne.s32.totalorder %s75, %s78
      %p87 = scmp.eq.s32.totalorder %s30, 1
      %p88 = por %p86, %p87
      %p89 = scmp.ne.s32.totalorder %s78, %s79
      %p90 = scmp.eq.s32.totalorder %s30, 0
      %p91 = por %p89, %p90
      %p92 = scmp.ne.s32.totalorder %s78, %s79
      %p93 = scmp.eq.s32.totalorder %s31, 1
      %p94 = por %p92, %p93
      %p96 = scmp.ne.s32.totalorder %s79, %s95
      %p97 = scmp.eq.s32.totalorder %s31, 0
      %p98 = por %p96, %p97
      %s99 = ssub.s32 %s32, %s44
      %s100 = ssub.s32 %s33, %s40
      %s101 = sor.u32 %s99, %s100
      %p102 = scmp.eq.s32.totalorder %s101, 0
      %s104 = sadd.s32 %s103, 1
      %s105 = scalar_select %p102, %s103, %s104
      %p108 = pneg %p102
      %p109 = scmp.eq.s32.totalorder %s25, 1
      %p110 = por %p108, %p109
      %p111 = scmp.ne.s32.totalorder %s103, %s106
      %p112 = scmp.eq.s32.totalorder %s25, 0
      %p113 = por %p111, %p112
      %p114 = scmp.ne.s32.totalorder %s103, %s106
      %p115 = scmp.eq.s32.totalorder %s30, 1
      %p116 = por %p114, %p115
      %p117 = scmp.ne.s32.totalorder %s106, %s107
      %p118 = scmp.eq.s32.totalorder %s30, 0
      %p119 = por %p117, %p118
      %p120 = scmp.ne.s32.totalorder %s106, %s107
      %p121 = scmp.eq.s32.totalorder %s31, 1
      %p122 = por %p120, %p121
      %p124 = scmp.ne.s32.totalorder %s107, %s123
      %p125 = scmp.eq.s32.totalorder %s31, 0
      %p126 = por %p124, %p125
      %s127 = ssub.s32 %s32, %s44
      %p128 = scmp.eq.s32.totalorder %s127, 0
      %s130 = sadd.s32 %s129, 1
      %s131 = scalar_select %p128, %s129, %s130
      %p134 = pneg %p128
      %p135 = scmp.eq.s32.totalorder %s25, 1
      %p136 = por %p134, %p135
      %p137 = scmp.ne.s32.totalorder %s129, %s132
      %p138 = scmp.eq.s32.totalorder %s25, 0
      %p139 = por %p137, %p138
      %p140 = scmp.ne.s32.totalorder %s129, %s132
      %p141 = scmp.eq.s32.totalorder %s30, 1
      %p142 = por %p140, %p141
      %p143 = scmp.ne.s32.totalorder %s132, %s133
      %p144 = scmp.eq.s32.totalorder %s30, 0
      %p145 = por %p143, %p144
      %p146 = scmp.ne.s32.totalorder %s132, %s133
      %p147 = scmp.eq.s32.totalorder %s31, 1
      %p148 = por %p146, %p147
      %p150 = scmp.ne.s32.totalorder %s133, %s149
      %p151 = scmp.eq.s32.totalorder %s31, 0
      %p152 = por %p150, %p151
      %s153 = ssub.s32 %s32, %s44
      %s154 = ssub.s32 %s33, %s40
      %s155 = sor.u32 %s153, %s154
      %p156 = scmp.eq.s32.totalorder %s155, 0
      %s158 = sadd.s32 %s157, 1
      %s159 = scalar_select %p156, %s157, %s158
      %p162 = pneg %p156
      %p163 = scmp.eq.s32.totalorder %s25, 1
      %p164 = por %p162, %p163
      %p165 = scmp.ne.s32.totalorder %s157, %s160
      %p166 = scmp.eq.s32.totalorder %s25, 0
      %p167 = por %p165, %p166
      %p168 = scmp.ne.s32.totalorder %s157, %s160
      %p169 = scmp.eq.s32.totalorder %s30, 1
      %p170 = por %p168, %p169
      %p171 = scmp.ne.s32.totalorder %s160, %s161
      %p172 = scmp.eq.s32.totalorder %s30, 0
      %p173 = por %p171, %p172
      %p174 = scmp.ne.s32.totalorder %s160, %s161
      %p175 = scmp.eq.s32.totalorder %s31, 1
      %p176 = por %p174, %p175
      %p178 = scmp.ne.s32.totalorder %s161, %s177
      %p179 = scmp.eq.s32.totalorder %s31, 0
      %p180 = por %p178, %p179
      %s182 = sadd.s32 %s181, 1
      %p185 = scmp.eq.s32.totalorder %s25, 1
      %p186 = scmp.ne.s32.totalorder %s181, %s183
      %p187 = scmp.eq.s32.totalorder %s25, 0
      %p188 = por %p186, %p187
      %p189 = scmp.ne.s32.totalorder %s181, %s183
      %p190 = scmp.eq.s32.totalorder %s30, 1
      %p191 = por %p189, %p190
      %p192 = scmp.ne.s32.totalorder %s183, %s184
      %p193 = scmp.eq.s32.totalorder %s30, 0
      %p194 = por %p192, %p193
      %p195 = scmp.ne.s32.totalorder %s183, %s184
      %p196 = scmp.eq.s32.totalorder %s31, 1
      %p197 = por %p195, %p196
      %p199 = scmp.ne.s32.totalorder %s184, %s198
      %p200 = scmp.eq.s32.totalorder %s31, 0
      %p201 = por %p199, %p200
      %s203 = sadd.s32 %s202, 1
      %p206 = scmp.eq.s32.totalorder %s25, 1
      %p207 = scmp.ne.s32.totalorder %s202, %s204
      %p208 = scmp.eq.s32.totalorder %s25, 0
      %p209 = por %p207, %p208
      %p210 = scmp.ne.s32.totalorder %s202, %s204
      %p211 = scmp.eq.s32.totalorder %s30, 1
      %p212 = por %p210, %p211
      %p213 = scmp.ne.s32.totalorder %s204, %s205
      %p214 = scmp.eq.s32.totalorder %s30, 0
      %p215 = por %p213, %p214
      %p216 = scmp.ne.s32.totalorder %s204, %s205
      %p217 = scmp.eq.s32.totalorder %s31, 1
      %p218 = por %p216, %p217
      %p220 = scmp.ne.s32.totalorder %s205, %s219
      %p221 = scmp.eq.s32.totalorder %s31, 0
      %p222 = por %p220, %p221
      %s224 = sadd.s32 %s223, 1
      %p227 = scmp.eq.s32.totalorder %s25, 1
      %p228 = scmp.ne.s32.totalorder %s223, %s225
      %p229 = scmp.eq.s32.totalorder %s25, 0
      %p230 = por %p228, %p229
      %p231 = scmp.ne.s32.totalorder %s223, %s225
      %p232 = scmp.eq.s32.totalorder %s30, 1
      %p233 = por %p231, %p232
      %p234 = scmp.ne.s32.totalorder %s225, %s226
      %p235 = scmp.eq.s32.totalorder %s30, 0
      %p236 = por %p234, %p235
      %p237 = scmp.ne.s32.totalorder %s225, %s226
      %p238 = scmp.eq.s32.totalorder %s31, 1
      %p239 = por %p237, %p238
      %p241 = scmp.ne.s32.totalorder %s226, %s240
      %p242 = scmp.eq.s32.totalorder %s31, 0
      %p243 = por %p241, %p242
      %s245 = sadd.s32 %s244, 1
      %p248 = scmp.eq.s32.totalorder %s25, 1
      %p249 = scmp.ne.s32.totalorder %s244, %s246
      %p250 = scmp.eq.s32.totalorder %s25, 0
      %p251 = por %p249, %p250
      %p252 = scmp.ne.s32.totalorder %s244, %s246
      %p253 = scmp.eq.s32.totalorder %s30, 1
      %p254 = por %p252, %p253
      %p255 = scmp.ne.s32.totalorder %s246, %s247
      %p256 = scmp.eq.s32.totalorder %s30, 0
      %p257 = por %p255, %p256
      %p258 = scmp.ne.s32.totalorder %s246, %s247
      %p259 = scmp.eq.s32.totalorder %s31, 1
      %p260 = por %p258, %p259
      %p262 = scmp.ne.s32.totalorder %s247, %s261
      %p263 = scmp.eq.s32.totalorder %s31, 0
      %p264 = por %p262, %p263
      %s265 = ssub.s32 %s32, %s44
      %s266 = ssub.s32 %s33, %s40
      %s267 = sor.u32 %s265, %s266
      %p268 = scmp.eq.s32.totalorder %s267, 0
      %s270 = sadd.s32 %s269, 1
      %s271 = scalar_select %p268, %s269, %s270
      %p274 = pneg %p268
      %p275 = scmp.eq.s32.totalorder %s25, 1
      %p276 = por %p274, %p275
      %p277 = scmp.ne.s32.totalorder %s269, %s272
      %p278 = scmp.eq.s32.totalorder %s25, 0
      %p279 = por %p277, %p278
      %p280 = scmp.ne.s32.totalorder %s269, %s272
      %p281 = scmp.eq.s32.totalorder %s30, 1
      %p282 = por %p280, %p281
      %p283 = scmp.ne.s32.totalorder %s272, %s273
      %p284 = scmp.eq.s32.totalorder %s30, 0
      %p285 = por %p283, %p284
      %p286 = scmp.ne.s32.totalorder %s272, %s273
      %p287 = scmp.eq.s32.totalorder %s31, 1
      %p288 = por %p286, %p287
      %p290 = scmp.ne.s32.totalorder %s273, %s289
      %p291 = scmp.eq.s32.totalorder %s31, 0
      %p292 = por %p290, %p291
      %p293 = scmp.le.s32.totalorder 1, %s25
      %p294 = scmp.lt.s32.totalorder %s25, 3
      %p295 = pnand %p293, %p294
      %p296 = pneg %p295
      // Predicated region
      $region9: #{tpu_custom_call.1} parent=5 // pred_check
        _
      $region10: #{tpu_custom_call.1} parent=5 // pred_check_branch
        %298 = sbr.rel (%p295) target = $region12
      $region11: #{tpu_custom_call.1} parent=5 // pred_region
        %s299 = ssub.s32 %s25, 1
        // Predicated region
        $region13: #{tpu_custom_call.1} parent=11 // pred_check
          %p300 = pneg %p194
        $region14: #{tpu_custom_call.1} parent=11 // pred_check_branch
          %302 = sbr.rel (%p300) target = $region16
        $region15: #{tpu_custom_call.1} parent=11 // pred_region
          _
        $region16: #{tpu_custom_call.1} parent=11 // pred_fallthru
          _
        // Predicated region
        $region17: #{tpu_custom_call.1} parent=11 // pred_check
          %p303 = pneg %p215
        $region18: #{tpu_custom_call.1} parent=11 // pred_check_branch
          %305 = sbr.rel (%p303) target = $region20
        $region19: #{tpu_custom_call.1} parent=11 // pred_region
          _
        $region20: #{tpu_custom_call.1} parent=11 // pred_fallthru
          _
        // Predicated region
        $region21: #{tpu_custom_call.1} parent=11 // pred_check
          %p306 = pneg %p236
        $region22: #{tpu_custom_call.1} parent=11 // pred_check_branch
          %308 = sbr.rel (%p306) target = $region24
        $region23: #{tpu_custom_call.1} parent=11 // pred_region
          %s310 = ssub.s32 2048, 2048
          %311 = vsyncadd [#allocation10], %s310
          %s312 = sshll.u32 [#allocation9], 4
          %s313 = int_to_ptr.vmem [resolvable:$true] %s312
          %318 = dma.hbm_to_vmem [thread:$0]  %s7, 2048, %s313, [#allocation10], 128, 128, 8
        $region24: #{tpu_custom_call.1} parent=11 // pred_fallthru
          _
        // Predicated region
        $region25: #{tpu_custom_call.1} parent=11 // pred_check
          %p319 = pneg %p257
        $region26: #{tpu_custom_call.1} parent=11 // pred_check_branch
          %321 = sbr.rel (%p319) target = $region28
        $region27: #{tpu_custom_call.1} parent=11 // pred_region
          _
        $region28: #{tpu_custom_call.1} parent=11 // pred_fallthru
          _
      $region12: #{tpu_custom_call.1} parent=5 // pred_fallthru
        _
      %p322 = scmp.lt.s32.totalorder %s25, 2
      // Predicated region
      $region29: #{tpu_custom_call.1} parent=5 // pred_check
        %p323 = pneg %p322
      $region30: #{tpu_custom_call.1} parent=5 // pred_check_branch
        %325 = sbr.rel (%p323) target = $region32
      $region31: #{tpu_custom_call.1} parent=5 // pred_region
        // Predicated region
        $region33: #{tpu_custom_call.1} parent=31 // pred_check
          %p326 = pneg %p59
        $region34: #{tpu_custom_call.1} parent=31 // pred_check_branch
          %328 = sbr.rel (%p326) target = $region36
        $region35: #{tpu_custom_call.1} parent=31 // pred_region
          %s329 = sand.u32 %s49, 1
          %s330 = scalar_lea.sflag [#allocation4], %s329
          %s331 = sand.u32 %s49, 1
          %s332 = smul.addr %s331, 8
          %s333 = scalar_lea.vmem [#allocation3], %s332
          %s335 = ssub.s32 128, 128
          %336 = vsyncadd %s330, %s335
          %s337 = sadd.s32 %s33, %s32
          %s338 = smul.addr %s337, 128
          %s339 = scalar_lea.hbm %s0, %s338
          %s341 = sshll.u32 %s333, 4
          %s342 = int_to_ptr.vmem [resolvable:$true] %s341
          %344 = dma.hbm_to_vmem [thread:$0]  %s339, 128, %s342, %s330
        $region36: #{tpu_custom_call.1} parent=31 // pred_fallthru
          _
        // Predicated region
        $region37: #{tpu_custom_call.1} parent=31 // pred_check
          %p345 = pneg %p85
        $region38: #{tpu_custom_call.1} parent=31 // pred_check_branch
          %347 = sbr.rel (%p345) target = $region40
        $region39: #{tpu_custom_call.1} parent=31 // pred_region
          %p348 = scmp.lt.s32.totalorder %s32, 1
          %s349 = scalar_select %p348, %s32, 1
          %s350 = smul.addr %s349, 2
          %s351 = scalar_lea.vmem %s1, %s350
        $region40: #{tpu_custom_call.1} parent=31 // pred_fallthru
          _
        // Predicated region
        $region41: #{tpu_custom_call.1} parent=31 // pred_check
          %p352 = pneg %p113
        $region42: #{tpu_custom_call.1} parent=31 // pred_check_branch
          %354 = sbr.rel (%p352) target = $region44
        $region43: #{tpu_custom_call.1} parent=31 // pred_region
          %s355 = sand.u32 %s25, 1
          %s356 = scalar_lea.sflag [#allocation7], %s355
          %s357 = sand.u32 %s103, 1
          %s358 = smul.addr %s357, 16
          %s359 = scalar_lea.vmem [#allocation6], %s358
          %s360 = smul.u32 8, %s33
          %s362 = ssub.s32 256, 256
          %363 = vsyncadd %s356, %s362
          %s364 = smul.addr %s32, 8
          %s365 = sadd.s32 %s360, %s364
          %s366 = smul.addr %s365, 32
          %s367 = scalar_lea.hbm %s2, %s366
          %s368 = sshll.u32 %s359, 4
          %s369 = int_to_ptr.vmem [resolvable:$true] %s368
          %374 = dma.hbm_to_vmem [thread:$0]  %s367, 256, %s369, %s356, 32, 32, 2
        $region44: #{tpu_custom_call.1} parent=31 // pred_fallthru
          _
        // Predicated region
        $region45: #{tpu_custom_call.1} parent=31 // pred_check
          %p375 = pneg %p139
        $region46: #{tpu_custom_call.1} parent=31 // pred_check_branch
          %377 = sbr.rel (%p375) target = $region48
        $region47: #{tpu_custom_call.1} parent=31 // pred_region
          %s378 = sand.u32 %s25, 1
          %s379 = scalar_lea.sflag [#allocation7], %s378
          %s380 = sand.u32 %s129, 1
          %s381 = smul.addr %s380, 2
          %s382 = scalar_lea.vmem [#allocation8], %s381
          %s384 = ssub.s32 32, 32
          %385 = vsyncadd %s379, %s384
          %s386 = smul.addr %s32, 32
          %s387 = scalar_lea.hbm %s3, %s386
          %s389 = sshll.u32 %s382, 4
          %s390 = int_to_ptr.vmem [resolvable:$true] %s389
          %392 = dma.hbm_to_vmem [thread:$0]  %s387, 32, %s390, %s379
        $region48: #{tpu_custom_call.1} parent=31 // pred_fallthru
          _
        // Predicated region
        $region49: #{tpu_custom_call.1} parent=31 // pred_check
          %p393 = pneg %p167
        $region50: #{tpu_custom_call.1} parent=31 // pred_check_branch
          %395 = sbr.rel (%p393) target = $region52
        $region51: #{tpu_custom_call.1} parent=31 // pred_region
          %p396 = scmp.lt.s32.totalorder %s32, 1
          %s397 = scalar_select %p396, %s32, 1
          %p398 = scmp.lt.s32.totalorder %s33, 0
          %s399 = scalar_select %p398, %s33, 0
          %s400 = sadd.s32 %s399, %s397
          %s401 = smul.addr %s400, 8
          %s402 = scalar_lea.vmem %s4, %s401
        $region52: #{tpu_custom_call.1} parent=31 // pred_fallthru
          _
      $region32: #{tpu_custom_call.1} parent=5 // pred_fallthru
        _
      %p403 = scmp.le.s32.totalorder 1, %s25
      %p404 = scmp.lt.s32.totalorder %s25, 3
      %p405 = pnand %p403, %p404
      %p406 = pneg %p405
      // Predicated region
      $region53: #{tpu_custom_call.1} parent=5 // pred_check
        _
      $region54: #{tpu_custom_call.1} parent=5 // pred_check_branch
        %408 = sbr.rel (%p405) target = $region56
      $region55: #{tpu_custom_call.1} parent=5 // pred_region
        %s409 = ssub.s32 %s25, 1
        %s410 = sand.u32 %s52, 1
        %s411 = scalar_lea.sflag [#allocation4], %s410
        %s412 = sand.u32 %s52, 1
        %s413 = smul.addr %s412, 8
        %s414 = scalar_lea.vmem [#allocation3], %s413
        // Predicated region
        $region57: #{tpu_custom_call.1} parent=55 // pred_check
          %p415 = pneg %p65
        $region58: #{tpu_custom_call.1} parent=55 // pred_check_branch
          %417 = sbr.rel (%p415) target = $region60
        $region59: #{tpu_custom_call.1} parent=55 // pred_region
          %418 = dma.done %s411, 128
        $region60: #{tpu_custom_call.1} parent=55 // pred_fallthru
          _
        %s419 = sand.u32 %s30, 1
        %s420 = scalar_lea.sflag [#allocation7], %s419
        %s421 = sand.u32 %s106, 1
        %s422 = smul.addr %s421, 16
        %s423 = scalar_lea.vmem [#allocation6], %s422
        // Predicated region
        $region61: #{tpu_custom_call.1} parent=55 // pred_check
          %p424 = pneg %p119
        $region62: #{tpu_custom_call.1} parent=55 // pred_check_branch
          %426 = sbr.rel (%p424) target = $region64
        $region63: #{tpu_custom_call.1} parent=55 // pred_region
          %427 = dma.done %s420, 256
        $region64: #{tpu_custom_call.1} parent=55 // pred_fallthru
          _
        %s428 = sand.u32 %s30, 1
        %s429 = scalar_lea.sflag [#allocation7], %s428
        %s430 = sand.u32 %s132, 1
        %s431 = smul.addr %s430, 2
        %s432 = scalar_lea.vmem [#allocation8], %s431
        // Predicated region
        $region65: #{tpu_custom_call.1} parent=55 // pred_check
          %p433 = pneg %p145
        $region66: #{tpu_custom_call.1} parent=55 // pred_check_branch
          %435 = sbr.rel (%p433) target = $region68
        $region67: #{tpu_custom_call.1} parent=55 // pred_region
          %436 = dma.done %s429, 32
        $region68: #{tpu_custom_call.1} parent=55 // pred_fallthru
          _
        // Predicated region
        $region69: #{tpu_custom_call.1} parent=55 // pred_check
          %p437 = pneg %p236
        $region70: #{tpu_custom_call.1} parent=55 // pred_check_branch
          %439 = sbr.rel (%p437) target = $region72
        $region71: #{tpu_custom_call.1} parent=55 // pred_region
          %440 = dma.done [#allocation10], 2048
        $region72: #{tpu_custom_call.1} parent=55 // pred_fallthru
          _
        %s441 = sand.u32 %s52, 1
        %s442 = scalar_lea.sflag [#allocation4], %s441
        %s443 = sand.u32 %s52, 1
        %s444 = smul.addr %s443, 8
        %s445 = scalar_lea.vmem [#allocation3], %s444
        %p446 = pneg %p65
        %p447 = pneg %p62
        %p448 = scmp.lt.s32.totalorder %s34, 1
        %s449 = scalar_select %p448, %s34, 1
        %s450 = smul.addr %s449, 2
        %s451 = scalar_lea.vmem %s1, %s450
        %p452 = pneg %p91
        %p453 = pneg %p88
        %s454 = sand.u32 %s30, 1
        %s455 = scalar_lea.sflag [#allocation7], %s454
        %s456 = sand.u32 %s106, 1
        %s457 = smul.addr %s456, 16
        %s458 = scalar_lea.vmem [#allocation6], %s457
        %p459 = pneg %p119
        %p460 = pneg %p116
        %s461 = sand.u32 %s30, 1
        %s462 = scalar_lea.sflag [#allocation7], %s461
        %s463 = sand.u32 %s132, 1
        %s464 = smul.addr %s463, 2
        %s465 = scalar_lea.vmem [#allocation8], %s464
        %p466 = pneg %p145
        %p467 = pneg %p142
        %p468 = scmp.lt.s32.totalorder %s34, 1
        %s469 = scalar_select %p468, %s34, 1
        %p470 = scmp.lt.s32.totalorder %s35, 0
        %s471 = scalar_select %p470, %s35, 0
        %s472 = sadd.s32 %s471, %s469
        %s473 = smul.addr %s472, 8
        %s474 = scalar_lea.vmem %s4, %s473
        %p475 = pneg %p173
        %p476 = pneg %p170
        %p477 = pneg %p194
        %p478 = pneg %p191
        %p479 = pneg %p215
        %p480 = pneg %p212
        %p481 = pneg %p236
        %p482 = pneg %p233
        %p483 = pneg %p257
        %p484 = pneg %p254
        %p485 = pneg %p285
        %p486 = pneg %p282
        %s487 = sand.u32 %s272, 1
        %s488 = scalar_lea.sflag [#allocation5], %s487
        %s489 = sand.u32 %s272, 1
        %s490 = smul.addr %s489, 8
        %s491 = scalar_lea.vmem [#allocation11], %s490
        %p492 = scmp.lt.s32.totalorder %s34, 1
        %s493 = scalar_select %p492, %s34, 1
        %s494 = smul.addr %s493, 2
        %s495 = scalar_lea.vmem %s1, %s494
        %s496 = smul.u32 8, %s35
        %p497 = scmp.lt.s32.totalorder %s34, 1
        %s498 = scalar_select %p497, %s34, 1
        %p499 = scmp.lt.s32.totalorder %s35, 0
        %s500 = scalar_select %p499, %s35, 0
        %s501 = sadd.s32 %s500, %s498
        %s502 = smul.addr %s501, 8
        %s503 = scalar_lea.vmem %s4, %s502
        %p504 = scmp.eq.s32.totalorder %s35, 0
        // Predicated region
        $region73: #{tpu_custom_call.1} parent=55 // pred_check
          %p505 = pneg %p504
        $region74: #{tpu_custom_call.1} parent=55 // pred_check_branch
          %507 = sbr.rel (%p505) target = $region76
        $region75: #{tpu_custom_call.1} parent=55 // pred_region
          %v508 = vld [vmem:[%s495] sm:$0x3]
          %v509 = vld [vmem:[#allocation9] sm:$0xff]
          %v510 = vld [vmem:[#allocation9 + $0x8] sm:$0xff]
          %v511 = vld [vmem:[#allocation9 + $0x10] sm:$0xff]
          %v512 = vld [vmem:[#allocation9 + $0x18] sm:$0xff]
          %v513 = vld [vmem:[#allocation9 + $0x20] sm:$0xff]
          %v514 = vld [vmem:[#allocation9 + $0x28] sm:$0xff]
          %v515 = vld [vmem:[#allocation9 + $0x30] sm:$0xff]
          %v516 = vld [vmem:[#allocation9 + $0x38] sm:$0xff]
          %v517 = vld [vmem:[#allocation9 + $0x40] sm:$0xff]
          %v518 = vld [vmem:[#allocation9 + $0x48] sm:$0xff]
          %v519 = vld [vmem:[#allocation9 + $0x50] sm:$0xff]
          %v520 = vld [vmem:[#allocation9 + $0x58] sm:$0xff]
          %v521 = vld [vmem:[#allocation9 + $0x60] sm:$0xff]
          %v522 = vld [vmem:[#allocation9 + $0x68] sm:$0xff]
          %v523 = vld [vmem:[#allocation9 + $0x70] sm:$0xff]
          %v524 = vld [vmem:[#allocation9 + $0x78] sm:$0xff]
          %v525 = vld [vmem:[%s8] sm:$0x1]
          %v527 = vlaneseq
          %v528 = vshrl.u32 %v527, 7
          %v529 = vsub.s32 0, %v528
          %v530 = vrot.slane %v525, %v529
          %532 = vmatprep.subr.mxu0 0.0
          %533 = vmatpush1.msra.mxu0 %v509
          %534 = vmatprep.subr.mxu0 0.0
          %535 = vmatpush1.msra.mxu0 %v510
          %536 = vmatprep.subr.mxu0 0.0
          %537 = vmatpush1.msra.mxu0 %v511
          %538 = vmatprep.subr.mxu0 0.0
          %539 = vmatpush1.msra.mxu0 %v512
          %540 = vmatprep.subr.mxu0 0.0
          %541 = vmatpush1.msra.mxu0 %v513
          %542 = vmatprep.subr.mxu0 0.0
          %543 = vmatpush1.msra.mxu0 %v514
          %544 = vmatprep.subr.mxu0 0.0
          %545 = vmatpush1.msra.mxu0 %v515
          %546 = vmatprep.subr.mxu0 0.0
          %547 = vmatpush1.msra.mxu0 %v516
          %548 = vmatprep.subr.mxu0 0.0
          %549 = vmatpush1.msra.mxu0 %v517
          %550 = vmatprep.subr.mxu0 0.0
          %551 = vmatpush1.msra.mxu0 %v518
          %552 = vmatprep.subr.mxu0 0.0
          %553 = vmatpush1.msra.mxu0 %v519
          %554 = vmatprep.subr.mxu0 0.0
          %555 = vmatpush1.msra.mxu0 %v520
          %556 = vmatprep.subr.mxu0 0.0
          %557 = vmatpush1.msra.mxu0 %v521
          %558 = vmatprep.subr.mxu0 0.0
          %559 = vmatpush1.msra.mxu0 %v522
          %560 = vmatprep.subr.mxu0 0.0
          %561 = vmatpush1.msra.mxu0 %v523
          %562 = vmatprep.subr.mxu0 0.0
          %563 = vmatpush1.msra.mxu0 %v524
          %564 = vmatprep.subr.mxu0 0.0
          %565 = vmatpush1.msra.mxu0 0.0
          %566 = vmatprep.subr.mxu0 0.0
          %567 = vmatpush1.msra.mxu0 0.0
          %568 = vmatprep.subr.mxu0 0.0
          %569 = vmatpush1.msra.mxu0 0.0
          %570 = vmatprep.subr.mxu0 0.0
          %571 = vmatpush1.msra.mxu0 0.0
          %572 = vmatprep.subr.mxu0 0.0
          %573 = vmatpush1.msra.mxu0 0.0
          %574 = vmatprep.subr.mxu0 0.0
          %575 = vmatpush1.msra.mxu0 0.0
          %576 = vmatprep.subr.mxu0 0.0
          %577 = vmatpush1.msra.mxu0 0.0
          %578 = vmatprep.subr.mxu0 0.0
          %579 = vmatpush1.msra.mxu0 0.0
          %580 = vmatprep.subr.mxu0 0.0
          %581 = vmatpush1.msra.mxu0 0.0
          %582 = vmatprep.subr.mxu0 0.0
          %583 = vmatpush1.msra.mxu0 0.0
          %584 = vmatprep.subr.mxu0 0.0
          %585 = vmatpush1.msra.mxu0 0.0
          %586 = vmatprep.subr.mxu0 0.0
          %587 = vmatpush1.msra.mxu0 0.0
          %588 = vmatprep.subr.mxu0 0.0
          %589 = vmatpush1.msra.mxu0 0.0
          %590 = vmatprep.subr.mxu0 0.0
          %591 = vmatpush1.msra.mxu0 0.0
          %592 = vmatprep.subr.mxu0 0.0
          %593 = vmatpush1.msra.mxu0 0.0
          %594 = vmatprep.subr.mxu0 0.0
          %595 = vmatpush1.msra.mxu0 0.0
          %596 = vmatprep.mubr.f32.mxu0 0.0
          %597 = vmatmul.mubr.f32.gmra.mrb[0].mxu0 %v508
          %v598 = vpop.f32.mrb[0].mxu0
          %v599 = vadd.f32 %v530, %v598
          %v600 = vpop.f32.mrb[0].mxu0
          %601 = vdwg.mxu0
          %v602 = vld [vmem:[%s432] sm:$0x3]
          %v603 = vmul.f32 %v602, %v599
          %604 = vst [vmem:[#allocation2] sm:$0x3] %v603
        $region76: #{tpu_custom_call.1} parent=55 // pred_fallthru
          _
        %v605 = vld [vmem:[%s414] sm:$0xff]
        %v606 = vld [vmem:[%s5] sm:$0xff]
        %v607 = vld [vmem:[%s5 + $0x8] sm:$0xff]
        %v608 = vld [vmem:[%s5 + $0x10] sm:$0xff]
        %v609 = vld [vmem:[%s5 + $0x18] sm:$0xff]
        %v610 = vld [vmem:[%s6] sm:$0x1]
        %v612 = vlaneseq
        %v613 = vshrl.u32 %v612, 7
        %v614 = vsub.s32 0, %v613
        %v615 = vrot.slane %v610, %v614
        %vm617 = vcmask 261120
        %v619 = vsel %vm617, %v605, 0
        %621 = vmatprep.subr.mxu0 0.0
        %622 = vmatpush1.msra.mxu0 %v606
        %623 = vmatprep.subr.mxu0 0.0
        %624 = vmatpush1.msra.mxu0 %v607
        %625 = vmatprep.subr.mxu0 0.0
        %626 = vmatpush1.msra.mxu0 %v608
        %627 = vmatprep.subr.mxu0 0.0
        %628 = vmatpush1.msra.mxu0 %v609
        %629 = vmatprep.subr.mxu0 0.0
        %630 = vmatpush1.msra.mxu0 0.0
        %631 = vmatprep.subr.mxu0 0.0
        %632 = vmatpush1.msra.mxu0 0.0
        %633 = vmatprep.subr.mxu0 0.0
        %634 = vmatpush1.msra.mxu0 0.0
        %635 = vmatprep.subr.mxu0 0.0
        %636 = vmatpush1.msra.mxu0 0.0
        %637 = vmatprep.subr.mxu0 0.0
        %638 = vmatpush1.msra.mxu0 0.0
        %639 = vmatprep.subr.mxu0 0.0
        %640 = vmatpush1.msra.mxu0 0.0
        %641 = vmatprep.subr.mxu0 0.0
        %642 = vmatpush1.msra.mxu0 0.0
        %643 = vmatprep.subr.mxu0 0.0
        %644 = vmatpush1.msra.mxu0 0.0
        %645 = vmatprep.subr.mxu0 0.0
        %646 = vmatpush1.msra.mxu0 0.0
        %647 = vmatprep.subr.mxu0 0.0
        %648 = vmatpush1.msra.mxu0 0.0
        %649 = vmatprep.subr.mxu0 0.0
        %650 = vmatpush1.msra.mxu0 0.0
        %651 = vmatprep.subr.mxu0 0.0
        %652 = vmatpush1.msra.mxu0 0.0
        %653 = vmatprep.subr.mxu0 0.0
        %654 = vmatpush1.msra.mxu0 0.0
        %655 = vmatprep.subr.mxu0 0.0
        %656 = vmatpush1.msra.mxu0 0.0
        %657 = vmatprep.subr.mxu0 0.0
        %658 = vmatpush1.msra.mxu0 0.0
        %659 = vmatprep.subr.mxu0 0.0
        %660 = vmatpush1.msra.mxu0 0.0
        %661 = vmatprep.subr.mxu0 0.0
        %662 = vmatpush1.msra.mxu0 0.0
        %663 = vmatprep.subr.mxu0 0.0
        %664 = vmatpush1.msra.mxu0 0.0
        %665 = vmatprep.subr.mxu0 0.0
        %666 = vmatpush1.msra.mxu0 0.0
        %667 = vmatprep.subr.mxu0 0.0
        %668 = vmatpush1.msra.mxu0 0.0
        %669 = vmatprep.subr.mxu0 0.0
        %670 = vmatpush1.msra.mxu0 0.0
        %671 = vmatprep.subr.mxu0 0.0
        %672 = vmatpush1.msra.mxu0 0.0
        %673 = vmatprep.subr.mxu0 0.0
        %674 = vmatpush1.msra.mxu0 0.0
        %675 = vmatprep.subr.mxu0 0.0
        %676 = vmatpush1.msra.mxu0 0.0
        %677 = vmatprep.subr.mxu0 0.0
        %678 = vmatpush1.msra.mxu0 0.0
        %679 = vmatprep.subr.mxu0 0.0
        %680 = vmatpush1.msra.mxu0 0.0
        %681 = vmatprep.subr.mxu0 0.0
        %682 = vmatpush1.msra.mxu0 0.0
        %683 = vmatprep.subr.mxu0 0.0
        %684 = vmatpush1.msra.mxu0 0.0
        %685 = vmatprep.mubr.f32.mxu0 0.0
        %686 = vmatmul.mubr.f32.gmra.mrb[0].mxu0 %v619
        %v687 = vpop.f32.mrb[0].mxu0
        %v688 = vadd.f32 %v615, %v687
        %v689 = vpop.f32.mrb[0].mxu0
        %690 = vdwg.mxu0
        %v691 = vld [vmem:[%s423] sm:$0x3]
        %v692 = vld [vmem:[%s423 + $0x2] sm:$0x3]
        %v693 = vld [vmem:[%s423 + $0x4] sm:$0x3]
        %v694 = vld [vmem:[%s423 + $0x6] sm:$0x3]
        %v695 = vld [vmem:[%s423 + $0x8] sm:$0x3]
        %v696 = vld [vmem:[%s423 + $0xa] sm:$0x3]
        %v697 = vld [vmem:[%s423 + $0xc] sm:$0x3]
        %v698 = vld [vmem:[%s423 + $0xe] sm:$0x3]
        %v699 = vld [vmem:[#allocation2] sm:$0x3]
        %v700 = vmul.f32 %v691, %v699
        %v701 = vmul.f32 %v692, %v699
        %v702 = vmul.f32 %v693, %v699
        %v703 = vmul.f32 %v694, %v699
        %v704 = vmul.f32 %v695, %v699
        %v705 = vmul.f32 %v696, %v699
        %v706 = vmul.f32 %v697, %v699
        %v707 = vmul.f32 %v698, %v699
        %vm708 = vcmask 1041408
        %v709 = vsel %vm708, %v700, 0.0
        %v710 = vrot.slane %v709, 4
        %v711 = vadd.f32 %v709, %v710
        %v712 = vrot.slane %v711, 2
        %v713 = vadd.f32 %v711, %v712
        %v714 = vrot.slane %v713, 1
        %v715 = vadd.f32 %v713, %v714
        %v716 = vsel %vm708, %v701, 0.0
        %v717 = vrot.slane %v716, 4
        %v718 = vadd.f32 %v716, %v717
        %v719 = vrot.slane %v718, 2
        %v720 = vadd.f32 %v718, %v719
        %v721 = vrot.slane %v720, 1
        %v722 = vadd.f32 %v720, %v721
        %v723 = vsel %vm708, %v702, 0.0
        %v724 = vrot.slane %v723, 4
        %v725 = vadd.f32 %v723, %v724
        %v726 = vrot.slane %v725, 2
        %v727 = vadd.f32 %v725, %v726
        %v728 = vrot.slane %v727, 1
        %v729 = vadd.f32 %v727, %v728
        %v730 = vsel %vm708, %v703, 0.0
        %v731 = vrot.slane %v730, 4
        %v732 = vadd.f32 %v730, %v731
        %v733 = vrot.slane %v732, 2
        %v734 = vadd.f32 %v732, %v733
        %v735 = vrot.slane %v734, 1
        %v736 = vadd.f32 %v734, %v735
        %v737 = vsel %vm708, %v704, 0.0
        %v738 = vrot.slane %v737, 4
        %v739 = vadd.f32 %v737, %v738
        %v740 = vrot.slane %v739, 2
        %v741 = vadd.f32 %v739, %v740
        %v742 = vrot.slane %v741, 1
        %v743 = vadd.f32 %v741, %v742
        %v744 = vsel %vm708, %v705, 0.0
        %v745 = vrot.slane %v744, 4
        %v746 = vadd.f32 %v744, %v745
        %v747 = vrot.slane %v746, 2
        %v748 = vadd.f32 %v746, %v747
        %v749 = vrot.slane %v748, 1
        %v750 = vadd.f32 %v748, %v749
        %v751 = vsel %vm708, %v706, 0.0
        %v752 = vrot.slane %v751, 4
        %v753 = vadd.f32 %v751, %v752
        %v754 = vrot.slane %v753, 2
        %v755 = vadd.f32 %v753, %v754
        %v756 = vrot.slane %v755, 1
        %v757 = vadd.f32 %v755, %v756
        %v758 = vsel %vm708, %v707, 0.0
        %v759 = vrot.slane %v758, 4
        %v760 = vadd.f32 %v758, %v759
        %v761 = vrot.slane %v760, 2
        %v762 = vadd.f32 %v760, %v761
        %v763 = vrot.slane %v762, 1
        %v764 = vadd.f32 %v762, %v763
        %773 = vrot.lane.b32.xlu0 %v715, 96
        %v774 = vpop.permute.xlu0 %773
        %775 = vrot.lane.b32.xlu0 %v722, 96
        %v776 = vpop.permute.xlu0 %775
        %777 = vrot.lane.b32.xlu0 %v729, 96
        %v778 = vpop.permute.xlu0 %777
        %779 = vrot.lane.b32.xlu0 %v736, 96
        %v780 = vpop.permute.xlu0 %779
        %781 = vrot.lane.b32.xlu0 %v743, 96
        %v782 = vpop.permute.xlu0 %781
        %783 = vrot.lane.b32.xlu0 %v750, 96
        %v784 = vpop.permute.xlu0 %783
        %785 = vrot.lane.b32.xlu0 %v757, 96
        %v786 = vpop.permute.xlu0 %785
        %787 = vrot.lane.b32.xlu0 %v764, 96
        %v788 = vpop.permute.xlu0 %787
        %v797 = vadd.f32 %v715, %v774
        %v798 = vadd.f32 %v722, %v776
        %v799 = vadd.f32 %v729, %v778
        %v800 = vadd.f32 %v736, %v780
        %v801 = vadd.f32 %v743, %v782
        %v802 = vadd.f32 %v750, %v784
        %v803 = vadd.f32 %v757, %v786
        %v804 = vadd.f32 %v764, %v788
        %805 = vrot.lane.b32.xlu0 %v715, 64
        %v806 = vpop.permute.xlu0 %805
        %807 = vrot.lane.b32.xlu0 %v722, 64
        %v808 = vpop.permute.xlu0 %807
        %809 = vrot.lane.b32.xlu0 %v729, 64
        %v810 = vpop.permute.xlu0 %809
        %811 = vrot.lane.b32.xlu0 %v736, 64
        %v812 = vpop.permute.xlu0 %811
        %813 = vrot.lane.b32.xlu0 %v743, 64
        %v814 = vpop.permute.xlu0 %813
        %815 = vrot.lane.b32.xlu0 %v750, 64
        %v816 = vpop.permute.xlu0 %815
        %817 = vrot.lane.b32.xlu0 %v757, 64
        %v818 = vpop.permute.xlu0 %817
        %819 = vrot.lane.b32.xlu0 %v764, 64
        %v820 = vpop.permute.xlu0 %819
        %v829 = vadd.f32 %v797, %v806
        %v830 = vadd.f32 %v798, %v808
        %v831 = vadd.f32 %v799, %v810
        %v832 = vadd.f32 %v800, %v812
        %v833 = vadd.f32 %v801, %v814
        %v834 = vadd.f32 %v802, %v816
        %v835 = vadd.f32 %v803, %v818
        %v836 = vadd.f32 %v804, %v820
        %837 = vrot.lane.b32.xlu0 %v715, 32
        %v838 = vpop.permute.xlu0 %837
        %839 = vrot.lane.b32.xlu0 %v722, 32
        %v840 = vpop.permute.xlu0 %839
        %841 = vrot.lane.b32.xlu0 %v729, 32
        %v842 = vpop.permute.xlu0 %841
        %843 = vrot.lane.b32.xlu0 %v736, 32
        %v844 = vpop.permute.xlu0 %843
        %845 = vrot.lane.b32.xlu0 %v743, 32
        %v846 = vpop.permute.xlu0 %845
        %847 = vrot.lane.b32.xlu0 %v750, 32
        %v848 = vpop.permute.xlu0 %847
        %849 = vrot.lane.b32.xlu0 %v757, 32
        %v850 = vpop.permute.xlu0 %849
        %851 = vrot.lane.b32.xlu0 %v764, 32
        %v852 = vpop.permute.xlu0 %851
        %v861 = vadd.f32 %v829, %v838
        %v862 = vadd.f32 %v830, %v840
        %v863 = vadd.f32 %v831, %v842
        %v864 = vadd.f32 %v832, %v844
        %v865 = vadd.f32 %v833, %v846
        %v866 = vadd.f32 %v834, %v848
        %v867 = vadd.f32 %v835, %v850
        %v868 = vadd.f32 %v836, %v852
        %v869 = vld [vmem:[%s432] sm:$0x3]
        %v870 = vmul.f32 %v691, %v869
        %v871 = vmul.f32 %v692, %v869
        %v872 = vmul.f32 %v693, %v869
        %v873 = vmul.f32 %v694, %v869
        %v874 = vmul.f32 %v695, %v869
        %v875 = vmul.f32 %v696, %v869
        %v876 = vmul.f32 %v697, %v869
        %v877 = vmul.f32 %v698, %v869
        %v878 = vsel %vm708, %v870, 0.0
        %v879 = vrot.slane %v878, 4
        %v880 = vadd.f32 %v878, %v879
        %v881 = vrot.slane %v880, 2
        %v882 = vadd.f32 %v880, %v881
        %v883 = vrot.slane %v882, 1
        %v884 = vadd.f32 %v882, %v883
        %v885 = vsel %vm708, %v871, 0.0
        %v886 = vrot.slane %v885, 4
        %v887 = vadd.f32 %v885, %v886
        %v888 = vrot.slane %v887, 2
        %v889 = vadd.f32 %v887, %v888
        %v890 = vrot.slane %v889, 1
        %v891 = vadd.f32 %v889, %v890
        %v892 = vsel %vm708, %v872, 0.0
        %v893 = vrot.slane %v892, 4
        %v894 = vadd.f32 %v892, %v893
        %v895 = vrot.slane %v894, 2
        %v896 = vadd.f32 %v894, %v895
        %v897 = vrot.slane %v896, 1
        %v898 = vadd.f32 %v896, %v897
        %v899 = vsel %vm708, %v873, 0.0
        %v900 = vrot.slane %v899, 4
        %v901 = vadd.f32 %v899, %v900
        %v902 = vrot.slane %v901, 2
        %v903 = vadd.f32 %v901, %v902
        %v904 = vrot.slane %v903, 1
        %v905 = vadd.f32 %v903, %v904
        %v906 = vsel %vm708, %v874, 0.0
        %v907 = vrot.slane %v906, 4
        %v908 = vadd.f32 %v906, %v907
        %v909 = vrot.slane %v908, 2
        %v910 = vadd.f32 %v908, %v909
        %v911 = vrot.slane %v910, 1
        %v912 = vadd.f32 %v910, %v911
        %v913 = vsel %vm708, %v875, 0.0
        %v914 = vrot.slane %v913, 4
        %v915 = vadd.f32 %v913, %v914
        %v916 = vrot.slane %v915, 2
        %v917 = vadd.f32 %v915, %v916
        %v918 = vrot.slane %v917, 1
        %v919 = vadd.f32 %v917, %v918
        %v920 = vsel %vm708, %v876, 0.0
        %v921 = vrot.slane %v920, 4
        %v922 = vadd.f32 %v920, %v921
        %v923 = vrot.slane %v922, 2
        %v924 = vadd.f32 %v922, %v923
        %v925 = vrot.slane %v924, 1
        %v926 = vadd.f32 %v924, %v925
        %v927 = vsel %vm708, %v877, 0.0
        %v928 = vrot.slane %v927, 4
        %v929 = vadd.f32 %v927, %v928
        %v930 = vrot.slane %v929, 2
        %v931 = vadd.f32 %v929, %v930
        %v932 = vrot.slane %v931, 1
        %v933 = vadd.f32 %v931, %v932
        %942 = vrot.lane.b32.xlu0 %v884, 96
        %v943 = vpop.permute.xlu0 %942
        %944 = vrot.lane.b32.xlu0 %v891, 96
        %v945 = vpop.permute.xlu0 %944
        %946 = vrot.lane.b32.xlu0 %v898, 96
        %v947 = vpop.permute.xlu0 %946
        %948 = vrot.lane.b32.xlu0 %v905, 96
        %v949 = vpop.permute.xlu0 %948
        %950 = vrot.lane.b32.xlu0 %v912, 96
        %v951 = vpop.permute.xlu0 %950
        %952 = vrot.lane.b32.xlu0 %v919, 96
        %v953 = vpop.permute.xlu0 %952
        %954 = vrot.lane.b32.xlu0 %v926, 96
        %v955 = vpop.permute.xlu0 %954
        %956 = vrot.lane.b32.xlu0 %v933, 96
        %v957 = vpop.permute.xlu0 %956
        %v966 = vadd.f32 %v884, %v943
        %v967 = vadd.f32 %v891, %v945
        %v968 = vadd.f32 %v898, %v947
        %v969 = vadd.f32 %v905, %v949
        %v970 = vadd.f32 %v912, %v951
        %v971 = vadd.f32 %v919, %v953
        %v972 = vadd.f32 %v926, %v955
        %v973 = vadd.f32 %v933, %v957
        %974 = vrot.lane.b32.xlu0 %v884, 64
        %v975 = vpop.permute.xlu0 %974
        %976 = vrot.lane.b32.xlu0 %v891, 64
        %v977 = vpop.permute.xlu0 %976
        %978 = vrot.lane.b32.xlu0 %v898, 64
        %v979 = vpop.permute.xlu0 %978
        %980 = vrot.lane.b32.xlu0 %v905, 64
        %v981 = vpop.permute.xlu0 %980
        %982 = vrot.lane.b32.xlu0 %v912, 64
        %v983 = vpop.permute.xlu0 %982
        %984 = vrot.lane.b32.xlu0 %v919, 64
        %v985 = vpop.permute.xlu0 %984
        %986 = vrot.lane.b32.xlu0 %v926, 64
        %v987 = vpop.permute.xlu0 %986
        %988 = vrot.lane.b32.xlu0 %v933, 64
        %v989 = vpop.permute.xlu0 %988
        %v998 = vadd.f32 %v966, %v975
        %v999 = vadd.f32 %v967, %v977
        %v1000 = vadd.f32 %v968, %v979
        %v1001 = vadd.f32 %v969, %v981
        %v1002 = vadd.f32 %v970, %v983
        %v1003 = vadd.f32 %v971, %v985
        %v1004 = vadd.f32 %v972, %v987
        %v1005 = vadd.f32 %v973, %v989
        %1006 = vrot.lane.b32.xlu0 %v884, 32
        %v1007 = vpop.permute.xlu0 %1006
        %1008 = vrot.lane.b32.xlu0 %v891, 32
        %v1009 = vpop.permute.xlu0 %1008
        %1010 = vrot.lane.b32.xlu0 %v898, 32
        %v1011 = vpop.permute.xlu0 %1010
        %1012 = vrot.lane.b32.xlu0 %v905, 32
        %v1013 = vpop.permute.xlu0 %1012
        %1014 = vrot.lane.b32.xlu0 %v912, 32
        %v1015 = vpop.permute.xlu0 %1014
        %1016 = vrot.lane.b32.xlu0 %v919, 32
        %v1017 = vpop.permute.xlu0 %1016
        %1018 = vrot.lane.b32.xlu0 %v926, 32
        %v1019 = vpop.permute.xlu0 %1018
        %1020 = vrot.lane.b32.xlu0 %v933, 32
        %v1021 = vpop.permute.xlu0 %1020
        %v1030 = vadd.f32 %v998, %v1007
        %v1031 = vadd.f32 %v999, %v1009
        %v1032 = vadd.f32 %v1000, %v1011
        %v1033 = vadd.f32 %v1001, %v1013
        %v1034 = vadd.f32 %v1002, %v1015
        %v1035 = vadd.f32 %v1003, %v1017
        %v1036 = vadd.f32 %v1004, %v1019
        %v1037 = vadd.f32 %v1005, %v1021
        %v1038 = vadd.f32 %v1030, 1e-20
        %v1039 = vadd.f32 %v1031, 1e-20
        %v1040 = vadd.f32 %v1032, 1e-20
        %v1041 = vadd.f32 %v1033, 1e-20
        %v1042 = vadd.f32 %v1034, 1e-20
        %v1043 = vadd.f32 %v1035, 1e-20
        %v1044 = vadd.f32 %v1036, 1e-20
        %v1045 = vadd.f32 %v1037, 1e-20
        %v1046 = vrcp.pop %v1038
        %v1047 = vmul.f32 %v861, %v1046
        %v1048 = vrcp.pop %v1039
        %v1049 = vmul.f32 %v862, %v1048
        %v1050 = vrcp.pop %v1040
        %v1051 = vmul.f32 %v863, %v1050
        %v1052 = vrcp.pop %v1041
        %v1053 = vmul.f32 %v864, %v1052
        %v1054 = vrcp.pop %v1042
        %v1055 = vmul.f32 %v865, %v1054
        %v1056 = vrcp.pop %v1043
        %v1057 = vmul.f32 %v866, %v1056
        %v1058 = vrcp.pop %v1044
        %v1059 = vmul.f32 %v867, %v1058
        %v1060 = vrcp.pop %v1045
        %v1061 = vmul.f32 %v868, %v1060
        %v1062 = vld [vmem:[%s503] sm:$0xff]
        %v1071 = vrot.slane %v1049, 7
        %vm1072 = vcmask 1041409
        %v1073 = vsel %vm1072, %v1071, %v1047
        %v1074 = vrot.slane %v1051, 6
        %vm1075 = vcmask 1042434
        %v1076 = vsel %vm1075, %v1074, %v1073
        %v1077 = vrot.slane %v1053, 5
        %vm1078 = vcmask 1043459
        %v1079 = vsel %vm1078, %v1077, %v1076
        %v1080 = vrot.slane %v1055, 4
        %vm1081 = vcmask 1044484
        %v1082 = vsel %vm1081, %v1080, %v1079
        %v1083 = vrot.slane %v1057, 3
        %vm1084 = vcmask 1045509
        %v1085 = vsel %vm1084, %v1083, %v1082
        %v1086 = vrot.slane %v1059, 2
        %vm1087 = vcmask 1046534
        %v1088 = vsel %vm1087, %v1086, %v1085
        %v1089 = vrot.slane %v1061, 1
        %vm1090 = vcmask 1047559
        %v1091 = vsel %vm1090, %v1089, %v1088
        %v1093 = vadd.f32 %v688, %v1091
        %1095 = vset.pattern.permute.xlu0 0
        %1096 = vperm.xlu0 %1095, %v1062
        %v1097 = vpop.permute.xlu0 %1096
        %v1099 = vmul.f32 %v1097, %v1093
        %1100 = vst.msk [vmem:[%s491] sm:$0xff] %vm617, %v1099
        %s1101 = sand.u32 %s272, 1
        %s1102 = scalar_lea.sflag [#allocation5], %s1101
        %s1103 = sand.u32 %s272, 1
        %s1104 = smul.addr %s1103, 8
        %s1105 = scalar_lea.vmem [#allocation11], %s1104
        // Predicated region
        $region77: #{tpu_custom_call.1} parent=55 // pred_check
          %p1106 = pneg %p282
        $region78: #{tpu_custom_call.1} parent=55 // pred_check_branch
          %1108 = sbr.rel (%p1106) target = $region80
        $region79: #{tpu_custom_call.1} parent=55 // pred_region
          %s1110 = ssub.s32 128, 128
          %1111 = vsyncadd %s1102, %s1110
          %s1112 = sadd.s32 %s35, %s34
          %s1113 = smul.addr %s1112, 128
          %s1114 = scalar_lea.hbm %s9, %s1113
          %s1116 = sshll.u32 %s1105, 4
          %s1117 = int_to_ptr.vmem [resolvable:$true] %s1116
          %1119 = dma.vmem_to_hbm [thread:$0]  %s1117, 128, %s1114, %s1102
        $region80: #{tpu_custom_call.1} parent=55 // pred_fallthru
          _
      $region56: #{tpu_custom_call.1} parent=5 // pred_fallthru
        _
      %p1120 = scmp.le.s32.totalorder 2, %s25
      // Predicated region
      $region81: #{tpu_custom_call.1} parent=5 // pred_check
        %p1121 = pneg %p1120
      $region82: #{tpu_custom_call.1} parent=5 // pred_check_branch
        %1123 = sbr.rel (%p1121) target = $region84
      $region83: #{tpu_custom_call.1} parent=5 // pred_region
        %s1124 = ssub.s32 %s25, 2
        // Predicated region
        $region85: #{tpu_custom_call.1} parent=83 // pred_check
          %p1125 = pneg %p288
        $region86: #{tpu_custom_call.1} parent=83 // pred_check_branch
          %1127 = sbr.rel (%p1125) target = $region88
        $region87: #{tpu_custom_call.1} parent=83 // pred_region
          %s1128 = sand.u32 %s273, 1
          %s1129 = scalar_lea.sflag [#allocation5], %s1128
          %s1130 = sand.u32 %s273, 1
          %s1131 = smul.addr %s1130, 8
          %s1132 = scalar_lea.vmem [#allocation11], %s1131
          %1133 = dma.done %s1129, 128
        $region88: #{tpu_custom_call.1} parent=83 // pred_fallthru
          _
      $region84: #{tpu_custom_call.1} parent=5 // pred_fallthru
        _
    $region6: #{tpu_custom_call.1} parent=1 // loop_footer
      %s29 = sadd.s32 1, %s25
    $region7: #{tpu_custom_call.1} parent=1 // loop_footer_branch
      %24 = sbr.rel target = $region3
    $region8: #{tpu_custom_call.1} parent=1 // loop_exit
      _
    %1134 = vsyncpa [#allocation4], 1
    %s1135 = scalar_lea.sflag [#allocation4], 1
    %1136 = vsyncpa %s1135, 1
    %1137 = vsyncpa [#allocation7], 1
    %s1138 = scalar_lea.sflag [#allocation7], 1
    %1139 = vsyncpa %s1138, 1
    %1140 = vsyncpa [#allocation10], 1
    %1141 = vsyncpa [#allocation5], 1
    %s1142 = scalar_lea.sflag [#allocation5], 1
    %1143 = vsyncpa %s1142, 1

</llo_original>
